<compile_context>
chip_gen: v7x
topology: tpu7x:2x2x1
jax: 0.10.0
libtpu: 0.0.40
codegen_flags: <defaults>
</compile_context>

<pallas_src>
import functools

import jax
import jax.numpy as jnp
from jax.experimental import pallas as pl
from jax.experimental.pallas import tpu as pltpu


# ---------------------------------------------------------------------------
# Kernel A: per-(batch, T-tile) MLP stack -> window-major per-window means
# ---------------------------------------------------------------------------
def _mlp_kernel(x_ref, w1_ref, b1_ref, w2_ref, b2_ref, w3_ref, b3_ref,
                wl_ref, bl_ref, y_ref, *, num_windows, s_pad, negative_slope):
    h = x_ref[0]                                              # (tile_t, in_pad) bf16
    for w_ref, b_ref in ((w1_ref, b1_ref), (w2_ref, b2_ref), (w3_ref, b3_ref)):
        z = jnp.dot(h, w_ref[...], preferred_element_type=jnp.float32) + b_ref[...]
        z = jnp.where(z > 0, z, negative_slope * z)           # LeakyReLU (dropout = identity)
        h = z.astype(jnp.bfloat16)
    # Fused last Linear: N = W*S_pad in one MXU pass, then 128-aligned lane
    # slices write each window's slab into the window-major output.
    y = jnp.dot(h, wl_ref[...], preferred_element_type=jnp.float32) + bl_ref[...]
    y = y.astype(y_ref.dtype)                                 # (tile_t, W*S_pad)
    for w in range(num_windows):
        y_ref[0, w] = y[:, w * s_pad:(w + 1) * s_pad]


# ---------------------------------------------------------------------------
# Kernel B: tiled MLPG matmul (Gx = R @ window-major y) + highway gate/combine
# ---------------------------------------------------------------------------
def _mlpg_kernel(r_ref, y_ref, xs_ref, wt_ref, bt_ref, out_ref, acc_ref):
    w = pl.program_id(2)
    kt = pl.program_id(3)
    prod = jnp.dot(r_ref[0], y_ref[0, 0], preferred_element_type=jnp.float32)

    is_first = jnp.logical_and(w == 0, kt == 0)

    @pl.when(is_first)
    def _():                       # init accumulator from first chunk (no zeros+add)
        acc_ref[...] = prod

    @pl.when(jnp.logical_not(is_first))
    def _():
        acc_ref[...] = acc_ref[...] + prod

    is_last = jnp.logical_and(w == pl.num_programs(2) - 1,
                              kt == pl.num_programs(3) - 1)

    @pl.when(is_last)
    def _():                       # finalize: gate + highway combine (f32 epilogue)
        xs = xs_ref[0]                                        # (tile_q, S_pad) f32
        tx = jax.nn.sigmoid(
            jnp.dot(xs.astype(jnp.bfloat16), wt_ref[...],
                    preferred_element_type=jnp.float32) + bt_ref[...])
        out_ref[0] = (xs + tx * acc_ref[...]).astype(out_ref.dtype)


# ---------------------------------------------------------------------------
# Wrapper
# ---------------------------------------------------------------------------
def _round_up(x, m):
    return ((x + m - 1) // m) * m


def _split_even(total, cap, unit):
    """Split `total` into n >= 1 equal tiles of size <= ~cap (rounded to unit)."""
    n = -(-total // cap)
    tile = _round_up(-(-total // n), unit)
    return tile, tile * n, n


def in2out_highway_forward(x, R, params, *, static_dim, negative_slope=0.01):
    """Runs the In2OutHighwayNet forward pass. Returns (y, x_static + Tx * Gx)."""
    if x.ndim == 2:                  # mimic x.unsqueeze(0)
        x = x[None]
    B, T, in_dim = x.shape
    out_dim = params["Wl"].shape[1]
    num_windows = out_dim // static_dim
    assert out_dim == num_windows * static_dim
    assert R.shape == (T, num_windows * T)
    assert len(params["H"]) == 3

    f32, bf16 = jnp.float32, jnp.bfloat16
    hidden = params["H"][0][0].shape[1]

    # ---- padded sizes: feature dims -> multiples of 128 (lane-dense) ----
    S_pad = _round_up(static_dim, 128)
    in_pad = _round_up(in_dim, 128)
    hid_pad = _round_up(hidden, 128)

    # Row tiling along T (sublane axis -> multiples of 16 for bf16 packing).
    tile_t, T_pad, n_t = _split_even(T, 512, 16)        # Kernel A rows
    tile_q, Q_pad, n_q = _split_even(T, 512, 16)        # Kernel B output rows

    # MLPG reduction chunk over T_pad (per window).  Single chunk when it fits
    # comfortably; otherwise a 128-multiple divisor (R's lane dim) <= 2048.
    if T_pad <= 4096:
        tile_kt = T_pad
    else:
        tile_kt = T_pad
        for d in range(2048, 127, -128):
            if T_pad % d == 0:
                tile_kt = d
                break
    n_kt = T_pad // tile_kt

    def pad_to(a, shape, dtype):
        pads = [(0, s - d) for s, d in zip(shape, a.shape)]
        return jnp.pad(a.astype(dtype), pads)

    # ---- operand preparation (wrapper-side layout plumbing only) ----
    x_p = pad_to(x, (B, T_pad, in_pad), bf16)

    (w1, b1), (w2, b2), (w3, b3) = params["H"]
    w1p = pad_to(w1, (in_pad, hid_pad), bf16)
    w2p = pad_to(w2, (hid_pad, hid_pad), bf16)
    w3p = pad_to(w3, (hid_pad, hid_pad), bf16)
    b1p = pad_to(b1, (1, hid_pad), f32)
    b2p = pad_to(b2, (1, hid_pad), f32)
    b3p = pad_to(b3, (1, hid_pad), f32)

    # Last Linear packed per window along the lane axis (window w occupies
    # columns [w*S_pad, w*S_pad + S)); fused matmul + aligned lane slices.
    wlp = pad_to(params["Wl"].reshape(hidden, num_windows, static_dim),
                 (hid_pad, num_windows, S_pad), bf16).reshape(hid_pad, num_windows * S_pad)
    blp = pad_to(params["bl"].reshape(num_windows, static_dim),
                 (num_windows, S_pad), f32).reshape(1, num_windows * S_pad)

    # Gate weights: bf16 operand for the MXU, f32 bias / f32 accumulation.
    wtp = pad_to(params["WT"], (S_pad, S_pad), bf16)
    btp = pad_to(params["bT"], (1, S_pad), f32)

    def _const(arr):
        zeros = (0,) * arr.ndim
        return pl.BlockSpec(arr.shape, lambda *_: zeros)

    # ---- Kernel A ----
    mlp_kernel = functools.partial(
        _mlp_kernel, num_windows=num_windows, s_pad=S_pad,
        negative_slope=negative_slope)

    y_win = pl.pallas_call(
        mlp_kernel,
        grid_spec=pltpu.PrefetchScalarGridSpec(
            num_scalar_prefetch=0,
            grid=(B, n_t),
            in_specs=[
                pl.BlockSpec((1, tile_t, in_pad), lambda b, t: (b, t, 0)),   # x rows
                _const(w1p), _const(b1p),
                _const(w2p), _const(b2p),
                _const(w3p), _const(b3p),
                _const(wlp), _const(blp),
            ],
            out_specs=pl.BlockSpec((1, num_windows, tile_t, S_pad),
                                   lambda b, t: (b, 0, t, 0)),
        ),
        out_shape=jax.ShapeDtypeStruct((B, num_windows, T_pad, S_pad), bf16),
        compiler_params=pltpu.CompilerParams(
            dimension_semantics=("parallel", "parallel"),
            vmem_limit_bytes=40 * 1024 * 1024),
    )(x_p, w1p, b1p, w2p, b2p, w3p, b3p, wlp, blp)

    # R rearranged window-first: R3[w, q, t'] = R[q, w*T + t'] (small, one-time).
    R3 = pad_to(R.reshape(T, num_windows, T).transpose(1, 0, 2),
                (num_windows, Q_pad, T_pad), bf16)
    xs_b = pad_to(x[:, :, :static_dim], (B, Q_pad, S_pad), f32)

    # Module return value y in the original (B, T, W*S) layout.
    y_out = (y_win[:, :, :T, :static_dim].transpose(0, 2, 1, 3)
             .reshape(B, T, out_dim).astype(f32))

    # ---- Kernel B ----
    out = pl.pallas_call(
        _mlpg_kernel,
        grid_spec=pltpu.PrefetchScalarGridSpec(
            num_scalar_prefetch=0,
            grid=(B, n_q, num_windows, n_kt),
            in_specs=[
                pl.BlockSpec((1, tile_q, tile_kt),
                             lambda b, q, w, k: (w, q, k)),                 # R tile
                pl.BlockSpec((1, 1, tile_kt, S_pad),
                             lambda b, q, w, k: (b, w, k, 0)),              # y (window-major)
                pl.BlockSpec((1, tile_q, S_pad),
                             lambda b, q, w, k: (b, q, 0)),                 # x_static
                _const(wtp), _const(btp),
            ],
            out_specs=pl.BlockSpec((1, tile_q, S_pad),
                                   lambda b, q, w, k: (b, q, 0)),
            scratch_shapes=[pltpu.VMEM((tile_q, S_pad), jnp.float32)],
        ),
        out_shape=jax.ShapeDtypeStruct((B, Q_pad, S_pad), f32),
        compiler_params=pltpu.CompilerParams(
            dimension_semantics=("parallel", "parallel", "arbitrary", "arbitrary"),
            vmem_limit_bytes=40 * 1024 * 1024),
    )(R3, y_win, xs_b, wtp, btp)

    return y_out, out[:, :T, :static_dim]


# ---------------------------------------------------------------------------
# Pure-JAX reference reproducing the PyTorch forward (eval mode, f32)
# ---------------------------------------------------------------------------
def _ref_forward(x, R, params, *, static_dim, negative_slope=0.01):
    if x.ndim == 2:
        x = x[None]
    B, T, _ = x.shape
    out_dim = params["Wl"].shape[1]
    num_windows = out_dim // static_dim

    x_static = x[:, :, :static_dim]
    Tx = jax.nn.sigmoid(x_static @ params["WT"] + params["bT"])
    h = x
    for W, b in params["H"]:
        h = h @ W + b
        h = jnp.where(h > 0, h, negative_slope * h)
    y = h @ params["Wl"] + params["bl"]
    # nnmnkwii UnitVarianceMLPG reshuffle: (B,T,W*S)->(B,W*T,S), then R @ .
    rm = y.reshape(B, T, num_windows, static_dim).transpose(0, 2, 1, 3)
    rm = rm.reshape(B, num_windows * T, static_dim)
    Gx = jnp.einsum("tk,bks->bts", R, rm)
    return y, x_static + Tx * Gx


def _init_params(key, in_dim, out_dim, static_dim, num_hidden, hidden_dim):
    """Deterministic synthetic parameters. Weights stored as (in, out)."""
    keys = jax.random.split(key, 2 * (num_hidden + 2))
    ki = iter(keys)

    def lin(kw, kb, fan_in, fan_out):
        s = 1.0 / jnp.sqrt(fan_in)
        W = jax.random.uniform(kw, (fan_in, fan_out), jnp.float32, -s, s)
        b = jax.random.uniform(kb, (1, fan_out), jnp.float32, -s, s)
        return W, b

    WT, bT = lin(next(ki), next(ki), static_dim, static_dim)
    in_sizes = [in_dim] + [hidden_dim] * (num_hidden - 1)
    out_sizes = [hidden_dim] * num_hidden
    H = [lin(next(ki), next(ki), i, o) for i, o in zip(in_sizes, out_sizes)]
    Wl, bl = lin(next(ki), next(ki), hidden_dim, out_dim)
    return {"WT": WT, "bT": bT, "H": H, "Wl": Wl, "bl": bl}


if __name__ == "__main__":
    # Small synthetic shapes consistent with the module:
    #   out_dim = 2 * static_dim (static + delta window), in_dim == out_dim.
    B, T = 2, 16
    static_dim = 8
    in_dim = out_dim = 2 * static_dim   # 16
    hidden_dim = 32
    num_hidden = 3
    num_windows = out_dim // static_dim  # 2

    key = jax.random.PRNGKey(0)
    k_x, k_r, k_p = jax.random.split(key, 3)

    x = jax.random.normal(k_x, (B, T, in_dim), jnp.float32)
    R = jax.random.normal(k_r, (T, num_windows * T), jnp.float32) * 0.1
    params = _init_params(k_p, in_dim, out_dim, static_dim, num_hidden, hidden_dim)

    y, out = in2out_highway_forward(x, R, params, static_dim=static_dim)
    jax.block_until_ready((y, out))

    y_ref, out_ref = _ref_forward(x, R, params, static_dim=static_dim)
    # bf16 matmul operands -> looser tolerances than pure-f32
    assert jnp.allclose(y, y_ref, atol=2e-2, rtol=2e-2), float(jnp.max(jnp.abs(y - y_ref)))
    assert jnp.allclose(out, out_ref, atol=2e-2, rtol=2e-2), float(jnp.max(jnp.abs(out - out_ref)))

    print("KERNEL_OK")
</pallas_src>

<mosaic_0001>
module attributes {stable_mosaic.version = 11 : i64} {
  func.func @_mlp_kernel(%arg0: i32, %arg1: i32, %arg2: memref<1x16x128xbf16, #tpu.memory_space<vmem>>, %arg3: memref<128x128xbf16, #tpu.memory_space<vmem>>, %arg4: memref<1x128xf32, #tpu.memory_space<vmem>>, %arg5: memref<128x128xbf16, #tpu.memory_space<vmem>>, %arg6: memref<1x128xf32, #tpu.memory_space<vmem>>, %arg7: memref<128x128xbf16, #tpu.memory_space<vmem>>, %arg8: memref<1x128xf32, #tpu.memory_space<vmem>>, %arg9: memref<128x256xbf16, #tpu.memory_space<vmem>>, %arg10: memref<1x256xf32, #tpu.memory_space<vmem>>, %arg11: memref<1x2x16x128xbf16, #tpu.memory_space<vmem>>) attributes {dimension_semantics = [#tpu.dimension_semantics<parallel>, #tpu.dimension_semantics<parallel>], iteration_bounds = array<i64: 2, 1>, scalar_prefetch = 0 : i64, scratch_operands = 0 : i64, tpu.core_type = #tpu.core_type<tc>, window_params = [{transform_indices = @transform_0, window_bounds = array<i64: 1, 16, 128>}, {pipeline_mode = #tpu.pipeline_mode<synchronous>, transform_indices = @transform_1, window_bounds = array<i64: 128, 128>}, {pipeline_mode = #tpu.pipeline_mode<synchronous>, transform_indices = @transform_2, window_bounds = array<i64: 1, 128>}, {pipeline_mode = #tpu.pipeline_mode<synchronous>, transform_indices = @transform_3, window_bounds = array<i64: 128, 128>}, {pipeline_mode = #tpu.pipeline_mode<synchronous>, transform_indices = @transform_4, window_bounds = array<i64: 1, 128>}, {pipeline_mode = #tpu.pipeline_mode<synchronous>, transform_indices = @transform_5, window_bounds = array<i64: 128, 128>}, {pipeline_mode = #tpu.pipeline_mode<synchronous>, transform_indices = @transform_6, window_bounds = array<i64: 1, 128>}, {pipeline_mode = #tpu.pipeline_mode<synchronous>, transform_indices = @transform_7, window_bounds = array<i64: 128, 256>}, {pipeline_mode = #tpu.pipeline_mode<synchronous>, transform_indices = @transform_8, window_bounds = array<i64: 1, 256>}, {transform_indices = @transform_9, window_bounds = array<i64: 1, 2, 16, 128>}]} {
    %c0 = arith.constant 0 : index
    %c0_0 = arith.constant 0 : index
    %c0_1 = arith.constant 0 : index
    %0 = vector.load %arg2[%c0, %c0_0, %c0_1] : memref<1x16x128xbf16, #tpu.memory_space<vmem>>, vector<1x16x128xbf16>
    %1 = vector.shape_cast %0 : vector<1x16x128xbf16> to vector<16x128xbf16>
    %c0_2 = arith.constant 0 : index
    %c0_3 = arith.constant 0 : index
    %2 = vector.load %arg3[%c0_2, %c0_3] : memref<128x128xbf16, #tpu.memory_space<vmem>>, vector<128x128xbf16>
    %cst = arith.constant dense<0.000000e+00> : vector<16x128xf32>
    %3 = tpu.matmul %1, %2, %cst {dimension_numbers = #tpu.dot_dimension_numbers<[1], [0], [0], [1], [0, 0, 1, 1], [], []>} : vector<16x128xbf16>, vector<128x128xbf16>, vector<16x128xf32> -> vector<16x128xf32>
    %c0_4 = arith.constant 0 : index
    %c0_5 = arith.constant 0 : index
    %4 = vector.load %arg4[%c0_4, %c0_5] : memref<1x128xf32, #tpu.memory_space<vmem>>, vector<1x128xf32>
    %5 = vector.broadcast %4 : vector<1x128xf32> to vector<16x128xf32>
    %6 = arith.addf %3, %5 : vector<16x128xf32>
    %cst_6 = arith.constant 0.000000e+00 : f32
    %7 = vector.broadcast %cst_6 : f32 to vector<16x128xf32>
    %8 = arith.cmpf ogt, %6, %7 : vector<16x128xf32>
    %cst_7 = arith.constant 0.00999999977 : f32
    %9 = vector.broadcast %cst_7 : f32 to vector<16x128xf32>
    %10 = arith.mulf %9, %6 : vector<16x128xf32>
    %11 = arith.select %8, %6, %10 : vector<16x128xi1>, vector<16x128xf32>
    %12 = arith.truncf %11 : vector<16x128xf32> to vector<16x128xbf16>
    %c0_8 = arith.constant 0 : index
    %c0_9 = arith.constant 0 : index
    %13 = vector.load %arg5[%c0_8, %c0_9] : memref<128x128xbf16, #tpu.memory_space<vmem>>, vector<128x128xbf16>
    %cst_10 = arith.constant dense<0.000000e+00> : vector<16x128xf32>
    %14 = tpu.matmul %12, %13, %cst_10 {dimension_numbers = #tpu.dot_dimension_numbers<[1], [0], [0], [1], [0, 0, 1, 1], [], []>} : vector<16x128xbf16>, vector<128x128xbf16>, vector<16x128xf32> -> vector<16x128xf32>
    %c0_11 = arith.constant 0 : index
    %c0_12 = arith.constant 0 : index
    %15 = vector.load %arg6[%c0_11, %c0_12] : memref<1x128xf32, #tpu.memory_space<vmem>>, vector<1x128xf32>
    %16 = vector.broadcast %15 : vector<1x128xf32> to vector<16x128xf32>
    %17 = arith.addf %14, %16 : vector<16x128xf32>
    %cst_13 = arith.constant 0.000000e+00 : f32
    %18 = vector.broadcast %cst_13 : f32 to vector<16x128xf32>
    %19 = arith.cmpf ogt, %17, %18 : vector<16x128xf32>
    %cst_14 = arith.constant 0.00999999977 : f32
    %20 = vector.broadcast %cst_14 : f32 to vector<16x128xf32>
    %21 = arith.mulf %20, %17 : vector<16x128xf32>
    %22 = arith.select %19, %17, %21 : vector<16x128xi1>, vector<16x128xf32>
    %23 = arith.truncf %22 : vector<16x128xf32> to vector<16x128xbf16>
    %c0_15 = arith.constant 0 : index
    %c0_16 = arith.constant 0 : index
    %24 = vector.load %arg7[%c0_15, %c0_16] : memref<128x128xbf16, #tpu.memory_space<vmem>>, vector<128x128xbf16>
    %cst_17 = arith.constant dense<0.000000e+00> : vector<16x128xf32>
    %25 = tpu.matmul %23, %24, %cst_17 {dimension_numbers = #tpu.dot_dimension_numbers<[1], [0], [0], [1], [0, 0, 1, 1], [], []>} : vector<16x128xbf16>, vector<128x128xbf16>, vector<16x128xf32> -> vector<16x128xf32>
    %c0_18 = arith.constant 0 : index
    %c0_19 = arith.constant 0 : index
    %26 = vector.load %arg8[%c0_18, %c0_19] : memref<1x128xf32, #tpu.memory_space<vmem>>, vector<1x128xf32>
    %27 = vector.broadcast %26 : vector<1x128xf32> to vector<16x128xf32>
    %28 = arith.addf %25, %27 : vector<16x128xf32>
    %cst_20 = arith.constant 0.000000e+00 : f32
    %29 = vector.broadcast %cst_20 : f32 to vector<16x128xf32>
    %30 = arith.cmpf ogt, %28, %29 : vector<16x128xf32>
    %cst_21 = arith.constant 0.00999999977 : f32
    %31 = vector.broadcast %cst_21 : f32 to vector<16x128xf32>
    %32 = arith.mulf %31, %28 : vector<16x128xf32>
    %33 = arith.select %30, %28, %32 : vector<16x128xi1>, vector<16x128xf32>
    %34 = arith.truncf %33 : vector<16x128xf32> to vector<16x128xbf16>
    %c0_22 = arith.constant 0 : index
    %c0_23 = arith.constant 0 : index
    %35 = vector.load %arg9[%c0_22, %c0_23] : memref<128x256xbf16, #tpu.memory_space<vmem>>, vector<128x256xbf16>
    %cst_24 = arith.constant dense<0.000000e+00> : vector<16x256xf32>
    %36 = tpu.matmul %34, %35, %cst_24 {dimension_numbers = #tpu.dot_dimension_numbers<[1], [0], [0], [1], [0, 0, 1, 1], [], []>} : vector<16x128xbf16>, vector<128x256xbf16>, vector<16x256xf32> -> vector<16x256xf32>
    %c0_25 = arith.constant 0 : index
    %c0_26 = arith.constant 0 : index
    %37 = vector.load %arg10[%c0_25, %c0_26] : memref<1x256xf32, #tpu.memory_space<vmem>>, vector<1x256xf32>
    %38 = vector.broadcast %37 : vector<1x256xf32> to vector<16x256xf32>
    %39 = arith.addf %36, %38 : vector<16x256xf32>
    %40 = arith.truncf %39 : vector<16x256xf32> to vector<16x256xbf16>
    %41 = vector.extract_strided_slice %40 {offsets = [0, 0], sizes = [16, 128], strides = [1, 1]} : vector<16x256xbf16> to vector<16x128xbf16>
    %c0_27 = arith.constant 0 : index
    %c0_28 = arith.constant 0 : index
    %c0_29 = arith.constant 0 : index
    %c0_30 = arith.constant 0 : index
    %42 = vector.load %arg11[%c0_27, %c0_28, %c0_29, %c0_30] : memref<1x2x16x128xbf16, #tpu.memory_space<vmem>>, vector<1x1x16x128xbf16>
    %43 = vector.shape_cast %42 : vector<1x1x16x128xbf16> to vector<16x128xbf16>
    %44 = vector.shape_cast %41 : vector<16x128xbf16> to vector<1x1x16x128xbf16>
    tpu.vector_store %arg11[%c0_27, %c0_28, %c0_29, %c0_30], %44 {strides = array<i32>} : memref<1x2x16x128xbf16, #tpu.memory_space<vmem>>, vector<1x1x16x128xbf16>,
    %45 = vector.extract_strided_slice %40 {offsets = [0, 128], sizes = [16, 128], strides = [1, 1]} : vector<16x256xbf16> to vector<16x128xbf16>
    %c0_31 = arith.constant 0 : index
    %c1 = arith.constant 1 : index
    %c0_32 = arith.constant 0 : index
    %c0_33 = arith.constant 0 : index
    %46 = vector.load %arg11[%c0_31, %c1, %c0_32, %c0_33] : memref<1x2x16x128xbf16, #tpu.memory_space<vmem>>, vector<1x1x16x128xbf16>
    %47 = vector.shape_cast %46 : vector<1x1x16x128xbf16> to vector<16x128xbf16>
    %48 = vector.shape_cast %45 : vector<16x128xbf16> to vector<1x1x16x128xbf16>
    tpu.vector_store %arg11[%c0_31, %c1, %c0_32, %c0_33], %48 {strides = array<i32>} : memref<1x2x16x128xbf16, #tpu.memory_space<vmem>>, vector<1x1x16x128xbf16>,
    return
  }
  func.func @transform_0(%arg0: i32, %arg1: i32) -> (i32, i32, i32) {
    %c0_i32 = arith.constant 0 : i32
    %c0_i32_0 = arith.constant 0 : i32
    return %arg0, %arg1, %c0_i32 : i32, i32, i32
  }
  func.func @transform_1(%arg0: i32, %arg1: i32) -> (i32, i32) {
    %c0_i32 = arith.constant 0 : i32
    %c0_i32_0 = arith.constant 0 : i32
    %c0_i32_1 = arith.constant 0 : i32
    return %c0_i32, %c0_i32_0 : i32, i32
  }
  func.func @transform_2(%arg0: i32, %arg1: i32) -> (i32, i32) {
    %c0_i32 = arith.constant 0 : i32
    %c0_i32_0 = arith.constant 0 : i32
    %c0_i32_1 = arith.constant 0 : i32
    return %c0_i32, %c0_i32_0 : i32, i32
  }
  func.func @transform_3(%arg0: i32, %arg1: i32) -> (i32, i32) {
    %c0_i32 = arith.constant 0 : i32
    %c0_i32_0 = arith.constant 0 : i32
    %c0_i32_1 = arith.constant 0 : i32
    return %c0_i32, %c0_i32_0 : i32, i32
  }
  func.func @transform_4(%arg0: i32, %arg1: i32) -> (i32, i32) {
    %c0_i32 = arith.constant 0 : i32
    %c0_i32_0 = arith.constant 0 : i32
    %c0_i32_1 = arith.constant 0 : i32
    return %c0_i32, %c0_i32_0 : i32, i32
  }
  func.func @transform_5(%arg0: i32, %arg1: i32) -> (i32, i32) {
    %c0_i32 = arith.constant 0 : i32
    %c0_i32_0 = arith.constant 0 : i32
    %c0_i32_1 = arith.constant 0 : i32
    return %c0_i32, %c0_i32_0 : i32, i32
  }
  func.func @transform_6(%arg0: i32, %arg1: i32) -> (i32, i32) {
    %c0_i32 = arith.constant 0 : i32
    %c0_i32_0 = arith.constant 0 : i32
    %c0_i32_1 = arith.constant 0 : i32
    return %c0_i32, %c0_i32_0 : i32, i32
  }
  func.func @transform_7(%arg0: i32, %arg1: i32) -> (i32, i32) {
    %c0_i32 = arith.constant 0 : i32
    %c0_i32_0 = arith.constant 0 : i32
    %c0_i32_1 = arith.constant 0 : i32
    return %c0_i32, %c0_i32_0 : i32, i32
  }
  func.func @transform_8(%arg0: i32, %arg1: i32) -> (i32, i32) {
    %c0_i32 = arith.constant 0 : i32
    %c0_i32_0 = arith.constant 0 : i32
    %c0_i32_1 = arith.constant 0 : i32
    return %c0_i32, %c0_i32_0 : i32, i32
  }
  func.func @transform_9(%arg0: i32, %arg1: i32) -> (i32, i32, i32, i32) {
    %c0_i32 = arith.constant 0 : i32
    %c0_i32_0 = arith.constant 0 : i32
    %c0_i32_1 = arith.constant 0 : i32
    return %arg0, %c0_i32, %arg1, %c0_i32_0 : i32, i32, i32, i32
  }
}

</mosaic_0001>

<llo_original>
// kernel: tpu_custom_call.1
$region0: #{tpu_custom_call.1}
  #allocation0 [shape = 'u32[]', space=smem, size = 0x4, offset = 0x4, fixed_abs, tag = 'smem constant byte address 0x4 - core index']
  #allocation1 [shape = 'u32[144,128]{1,0:T(1,128)}', space=vmem, size = 0x12000, scoped, tag = 'internal scratch']
  %s0 = inlined_call_operand.hbm [shape: bf16[2,16,128], index: 0, kind: input, shape index: {}]
  %s1 = inlined_call_operand.hbm [shape: bf16[128,128], index: 1, kind: input, shape index: {}]
  %s2 = inlined_call_operand.vmem [shape: f32[1,128], index: 2, kind: input, shape index: {}]
  %s3 = inlined_call_operand.hbm [shape: bf16[128,128], index: 3, kind: input, shape index: {}]
  %s4 = inlined_call_operand.vmem [shape: f32[1,128], index: 4, kind: input, shape index: {}]
  %s5 = inlined_call_operand.hbm [shape: bf16[128,128], index: 5, kind: input, shape index: {}]
  %s6 = inlined_call_operand.vmem [shape: f32[1,128], index: 6, kind: input, shape index: {}]
  %s7 = inlined_call_operand.hbm [shape: bf16[128,256], index: 7, kind: input, shape index: {}]
  %s8 = inlined_call_operand.vmem [shape: f32[1,256], index: 8, kind: input, shape index: {}]
  %s9 = inlined_call_operand.hbm [shape: bf16[2,2,16,128], index: 9, kind: output, shape index: {}]
  %s10 = sld [smem:[#allocation0]]
  $region89: #{tpu_custom_call.1} parent=0
    _
  %s12 = ssub.s32 1, %s10
  %s13 = scalar_select 0, %s12, %s10
  $region1: #{tpu_custom_call.1} parent=0
    #allocation2 [shape = 'u8[8192]{0}', space=vmem, size = 0x2000, scoped, tag = 'input window, operand 0']
    #allocation3 [shape = 's32[2]{0}', space=sflag, size = 0x8, scoped, tag = 'scoped memory for tpu_custom_call.1']
    #allocation4 [shape = 's32[2]{0}', space=sflag, size = 0x8, scoped, tag = 'scoped memory for tpu_custom_call.1']
    #allocation5 [shape = 'u8[32768]{0}', space=vmem, size = 0x8000, scoped, tag = 'input window, operand 1, single buffered']
    #allocation6 [shape = 's32[1]{0}', space=sflag, size = 0x4, scoped, tag = 'scoped memory for tpu_custom_call.1']
    #allocation7 [shape = 'u8[32768]{0}', space=vmem, size = 0x8000, scoped, tag = 'input window, operand 3, single buffered']
    #allocation8 [shape = 'u8[32768]{0}', space=vmem, size = 0x8000, scoped, tag = 'input window, operand 5, single buffered']
    #allocation9 [shape = 's32[1]{0}', space=sflag, size = 0x4, scoped, tag = 'scoped memory for tpu_custom_call.1']
    #allocation10 [shape = 'u8[65536]{0}', space=vmem, size = 0x10000, scoped, tag = 'input window, operand 7, single buffered']
    #allocation11 [shape = 'u8[16384]{0}', space=vmem, size = 0x4000, scoped, tag = 'output window, operand 0']
    %14 = vsyncpa [#allocation3], 0
    %s15 = scalar_lea.sflag [#allocation3], 1
    %16 = vsyncpa %s15, 0
    %17 = vsyncpa [#allocation6], 0
    %18 = vsyncpa [#allocation9], 0
    %19 = vsyncpa [#allocation4], 0
    %s20 = scalar_lea.sflag [#allocation4], 1
    %21 = vsyncpa %s20, 0
    loop: start=0, step=1, limit=4
    $region2: #{tpu_custom_call.1} parent=1 // loop_pre_header
      _
    $region3: #{tpu_custom_call.1} parent=1 // loop_header
      %s23 = sphi 0, %s27
      %p24 = scmp.ge.s32.totalorder %s23, 4
      %s30 = sphi 0, %s42
      %s31 = sphi 0, %s38
      %s32 = sphi 0, %s30
      %s33 = sphi 0, %s31
      %s34 = sphi 0, %s32
      %s35 = sphi 0, %s33
      %s47 = sphi 0, %s49
      %s50 = sphi 0, %s47
      %s51 = sphi 0, %s50
      %s67 = sphi 0, %s51
      %s71 = sphi 0, %s71
      %s73 = sphi 0, %s71
      %s74 = sphi 0, %s73
      %s88 = sphi 0, %s74
      %s92 = sphi 0, %s92
      %s94 = sphi 0, %s92
      %s95 = sphi 0, %s94
      %s109 = sphi 0, %s95
      %s113 = sphi 0, %s113
      %s115 = sphi 0, %s113
      %s116 = sphi 0, %s115
      %s130 = sphi 0, %s116
      %s134 = sphi 0, %s134
      %s136 = sphi 0, %s134
      %s137 = sphi 0, %s136
      %s151 = sphi 0, %s137
      %s155 = sphi 0, %s155
      %s157 = sphi 0, %s155
      %s158 = sphi 0, %s157
      %s172 = sphi 0, %s158
      %s176 = sphi 0, %s176
      %s178 = sphi 0, %s176
      %s179 = sphi 0, %s178
      %s193 = sphi 0, %s179
      %s197 = sphi 0, %s197
      %s199 = sphi 0, %s197
      %s200 = sphi 0, %s199
      %s214 = sphi 0, %s200
      %s218 = sphi 0, %s218
      %s220 = sphi 0, %s218
      %s221 = sphi 0, %s220
      %s235 = sphi 0, %s221
      %s243 = sphi 0, %s245
      %s246 = sphi 0, %s243
      %s247 = sphi 0, %s246
      %s263 = sphi 0, %s247
    $region4: #{tpu_custom_call.1} parent=1 // loop_header_branch
      %26 = sbr.rel (%p24) target = $region8
    $region5: #{tpu_custom_call.1} parent=1 // loop_body
      %s28 = ssub.s32 %s23, 1
      %s29 = ssub.s32 %s23, 2
      %s36 = sadd.s32 1, %s31
      %p37 = scmp.ge.s32.totalorder %s36, 1
      %s38 = scalar_select %p37, 0, %s36
      %s39 = sadd.s32 1, %s30
      %s40 = scalar_select %p37, %s39, %s30
      %p41 = scmp.ge.s32.totalorder %s40, 2
      %s42 = scalar_select %p41, 0, %s40
      %s43 = ssub.s32 %s30, %s42
      %s44 = ssub.s32 %s31, %s38
      %s45 = sor.u32 %s43, %s44
      %p46 = scmp.eq.s32.totalorder %s45, 0
      %s48 = sadd.s32 %s47, 1
      %s49 = scalar_select %p46, %s47, %s48
      %p52 = pneg %p46
      %p53 = scmp.eq.s32.totalorder %s23, 1
      %p54 = por %p52, %p53
      %p55 = scmp.ne.s32.totalorder %s47, %s50
      %p56 = scmp.eq.s32.totalorder %s23, 0
      %p57 = por %p55, %p56
      %p58 = scmp.ne.s32.totalorder %s47, %s50
      %p59 = scmp.eq.s32.totalorder %s28, 1
      %p60 = por %p58, %p59
      %p61 = scmp.ne.s32.totalorder %s50, %s51
      %p62 = scmp.eq.s32.totalorder %s28, 0
      %p63 = por %p61, %p62
      %p64 = scmp.ne.s32.totalorder %s50, %s51
      %p65 = scmp.eq.s32.totalorder %s29, 1
      %p66 = por %p64, %p65
      %p68 = scmp.ne.s32.totalorder %s51, %s67
      %p69 = scmp.eq.s32.totalorder %s29, 0
      %p70 = por %p68, %p69
      %s72 = sadd.s32 %s71, 1
      %p75 = scmp.eq.s32.totalorder %s23, 1
      %p76 = scmp.ne.s32.totalorder %s71, %s73
      %p77 = scmp.eq.s32.totalorder %s23, 0
      %p78 = por %p76, %p77
      %p79 = scmp.ne.s32.totalorder %s71, %s73
      %p80 = scmp.eq.s32.totalorder %s28, 1
      %p81 = por %p79, %p80
      %p82 = scmp.ne.s32.totalorder %s73, %s74
      %p83 = scmp.eq.s32.totalorder %s28, 0
      %p84 = por %p82, %p83
      %p85 = scmp.ne.s32.totalorder %s73, %s74
      %p86 = scmp.eq.s32.totalorder %s29, 1
      %p87 = por %p85, %p86
      %p89 = scmp.ne.s32.totalorder %s74, %s88
      %p90 = scmp.eq.s32.totalorder %s29, 0
      %p91 = por %p89, %p90
      %s93 = sadd.s32 %s92, 1
      %p96 = scmp.eq.s32.totalorder %s23, 1
      %p97 = scmp.ne.s32.totalorder %s92, %s94
      %p98 = scmp.eq.s32.totalorder %s23, 0
      %p99 = por %p97, %p98
      %p100 = scmp.ne.s32.totalorder %s92, %s94
      %p101 = scmp.eq.s32.totalorder %s28, 1
      %p102 = por %p100, %p101
      %p103 = scmp.ne.s32.totalorder %s94, %s95
      %p104 = scmp.eq.s32.totalorder %s28, 0
      %p105 = por %p103, %p104
      %p106 = scmp.ne.s32.totalorder %s94, %s95
      %p107 = scmp.eq.s32.totalorder %s29, 1
      %p108 = por %p106, %p107
      %p110 = scmp.ne.s32.totalorder %s95, %s109
      %p111 = scmp.eq.s32.totalorder %s29, 0
      %p112 = por %p110, %p111
      %s114 = sadd.s32 %s113, 1
      %p117 = scmp.eq.s32.totalorder %s23, 1
      %p118 = scmp.ne.s32.totalorder %s113, %s115
      %p119 = scmp.eq.s32.totalorder %s23, 0
      %p120 = por %p118, %p119
      %p121 = scmp.ne.s32.totalorder %s113, %s115
      %p122 = scmp.eq.s32.totalorder %s28, 1
      %p123 = por %p121, %p122
      %p124 = scmp.ne.s32.totalorder %s115, %s116
      %p125 = scmp.eq.s32.totalorder %s28, 0
      %p126 = por %p124, %p125
      %p127 = scmp.ne.s32.totalorder %s115, %s116
      %p128 = scmp.eq.s32.totalorder %s29, 1
      %p129 = por %p127, %p128
      %p131 = scmp.ne.s32.totalorder %s116, %s130
      %p132 = scmp.eq.s32.totalorder %s29, 0
      %p133 = por %p131, %p132
      %s135 = sadd.s32 %s134, 1
      %p138 = scmp.eq.s32.totalorder %s23, 1
      %p139 = scmp.ne.s32.totalorder %s134, %s136
      %p140 = scmp.eq.s32.totalorder %s23, 0
      %p141 = por %p139, %p140
      %p142 = scmp.ne.s32.totalorder %s134, %s136
      %p143 = scmp.eq.s32.totalorder %s28, 1
      %p144 = por %p142, %p143
      %p145 = scmp.ne.s32.totalorder %s136, %s137
      %p146 = scmp.eq.s32.totalorder %s28, 0
      %p147 = por %p145, %p146
      %p148 = scmp.ne.s32.totalorder %s136, %s137
      %p149 = scmp.eq.s32.totalorder %s29, 1
      %p150 = por %p148, %p149
      %p152 = scmp.ne.s32.totalorder %s137, %s151
      %p153 = scmp.eq.s32.totalorder %s29, 0
      %p154 = por %p152, %p153
      %s156 = sadd.s32 %s155, 1
      %p159 = scmp.eq.s32.totalorder %s23, 1
      %p160 = scmp.ne.s32.totalorder %s155, %s157
      %p161 = scmp.eq.s32.totalorder %s23, 0
      %p162 = por %p160, %p161
      %p163 = scmp.ne.s32.totalorder %s155, %s157
      %p164 = scmp.eq.s32.totalorder %s28, 1
      %p165 = por %p163, %p164
      %p166 = scmp.ne.s32.totalorder %s157, %s158
      %p167 = scmp.eq.s32.totalorder %s28, 0
      %p168 = por %p166, %p167
      %p169 = scmp.ne.s32.totalorder %s157, %s158
      %p170 = scmp.eq.s32.totalorder %s29, 1
      %p171 = por %p169, %p170
      %p173 = scmp.ne.s32.totalorder %s158, %s172
      %p174 = scmp.eq.s32.totalorder %s29, 0
      %p175 = por %p173, %p174
      %s177 = sadd.s32 %s176, 1
      %p180 = scmp.eq.s32.totalorder %s23, 1
      %p181 = scmp.ne.s32.totalorder %s176, %s178
      %p182 = scmp.eq.s32.totalorder %s23, 0
      %p183 = por %p181, %p182
      %p184 = scmp.ne.s32.totalorder %s176, %s178
      %p185 = scmp.eq.s32.totalorder %s28, 1
      %p186 = por %p184, %p185
      %p187 = scmp.ne.s32.totalorder %s178, %s179
      %p188 = scmp.eq.s32.totalorder %s28, 0
      %p189 = por %p187, %p188
      %p190 = scmp.ne.s32.totalorder %s178, %s179
      %p191 = scmp.eq.s32.totalorder %s29, 1
      %p192 = por %p190, %p191
      %p194 = scmp.ne.s32.totalorder %s179, %s193
      %p195 = scmp.eq.s32.totalorder %s29, 0
      %p196 = por %p194, %p195
      %s198 = sadd.s32 %s197, 1
      %p201 = scmp.eq.s32.totalorder %s23, 1
      %p202 = scmp.ne.s32.totalorder %s197, %s199
      %p203 = scmp.eq.s32.totalorder %s23, 0
      %p204 = por %p202, %p203
      %p205 = scmp.ne.s32.totalorder %s197, %s199
      %p206 = scmp.eq.s32.totalorder %s28, 1
      %p207 = por %p205, %p206
      %p208 = scmp.ne.s32.totalorder %s199, %s200
      %p209 = scmp.eq.s32.totalorder %s28, 0
      %p210 = por %p208, %p209
      %p211 = scmp.ne.s32.totalorder %s199, %s200
      %p212 = scmp.eq.s32.totalorder %s29, 1
      %p213 = por %p211, %p212
      %p215 = scmp.ne.s32.totalorder %s200, %s214
      %p216 = scmp.eq.s32.totalorder %s29, 0
      %p217 = por %p215, %p216
      %s219 = sadd.s32 %s218, 1
      %p222 = scmp.eq.s32.totalorder %s23, 1
      %p223 = scmp.ne.s32.totalorder %s218, %s220
      %p224 = scmp.eq.s32.totalorder %s23, 0
      %p225 = por %p223, %p224
      %p226 = scmp.ne.s32.totalorder %s218, %s220
      %p227 = scmp.eq.s32.totalorder %s28, 1
      %p228 = por %p226, %p227
      %p229 = scmp.ne.s32.totalorder %s220, %s221
      %p230 = scmp.eq.s32.totalorder %s28, 0
      %p231 = por %p229, %p230
      %p232 = scmp.ne.s32.totalorder %s220, %s221
      %p233 = scmp.eq.s32.totalorder %s29, 1
      %p234 = por %p232, %p233
      %p236 = scmp.ne.s32.totalorder %s221, %s235
      %p237 = scmp.eq.s32.totalorder %s29, 0
      %p238 = por %p236, %p237
      %s239 = ssub.s32 %s30, %s42
      %s240 = ssub.s32 %s31, %s38
      %s241 = sor.u32 %s239, %s240
      %p242 = scmp.eq.s32.totalorder %s241, 0
      %s244 = sadd.s32 %s243, 1
      %s245 = scalar_select %p242, %s243, %s244
      %p248 = pneg %p242
      %p249 = scmp.eq.s32.totalorder %s23, 1
      %p250 = por %p248, %p249
      %p251 = scmp.ne.s32.totalorder %s243, %s246
      %p252 = scmp.eq.s32.totalorder %s23, 0
      %p253 = por %p251, %p252
      %p254 = scmp.ne.s32.totalorder %s243, %s246
      %p255 = scmp.eq.s32.totalorder %s28, 1
      %p256 = por %p254, %p255
      %p257 = scmp.ne.s32.totalorder %s246, %s247
      %p258 = scmp.eq.s32.totalorder %s28, 0
      %p259 = por %p257, %p258
      %p260 = scmp.ne.s32.totalorder %s246, %s247
      %p261 = scmp.eq.s32.totalorder %s29, 1
      %p262 = por %p260, %p261
      %p264 = scmp.ne.s32.totalorder %s247, %s263
      %p265 = scmp.eq.s32.totalorder %s29, 0
      %p266 = por %p264, %p265
      %p267 = scmp.le.s32.totalorder 1, %s23
      %p268 = scmp.lt.s32.totalorder %s23, 3
      %p269 = pnand %p267, %p268
      %p270 = pneg %p269
      // Predicated region
      $region9: #{tpu_custom_call.1} parent=5 // pred_check
        _
      $region10: #{tpu_custom_call.1} parent=5 // pred_check_branch
        %272 = sbr.rel (%p269) target = $region12
      $region11: #{tpu_custom_call.1} parent=5 // pred_region
        %s273 = ssub.s32 %s23, 1
        // Predicated region
        $region13: #{tpu_custom_call.1} parent=11 // pred_check
          %p274 = pneg %p84
        $region14: #{tpu_custom_call.1} parent=11 // pred_check_branch
          %276 = sbr.rel (%p274) target = $region16
        $region15: #{tpu_custom_call.1} parent=11 // pred_region
          %s278 = ssub.s32 1024, 1024
          %279 = vsyncadd [#allocation6], %s278
          %s280 = sshll.u32 [#allocation5], 4
          %s281 = int_to_ptr.vmem [resolvable:$true] %s280
          %286 = dma.hbm_to_vmem [thread:$0]  %s1, 1024, %s281, [#allocation6], 64, 64, 4
        $region16: #{tpu_custom_call.1} parent=11 // pred_fallthru
          _
        // Predicated region
        $region17: #{tpu_custom_call.1} parent=11 // pred_check
          %p287 = pneg %p105
        $region18: #{tpu_custom_call.1} parent=11 // pred_check_branch
          %289 = sbr.rel (%p287) target = $region20
        $region19: #{tpu_custom_call.1} parent=11 // pred_region
          _
        $region20: #{tpu_custom_call.1} parent=11 // pred_fallthru
          _
        // Predicated region
        $region21: #{tpu_custom_call.1} parent=11 // pred_check
          %p290 = pneg %p126
        $region22: #{tpu_custom_call.1} parent=11 // pred_check_branch
          %292 = sbr.rel (%p290) target = $region24
        $region23: #{tpu_custom_call.1} parent=11 // pred_region
          %s294 = ssub.s32 1024, 1024
          %295 = vsyncadd [#allocation6], %s294
          %s296 = sshll.u32 [#allocation7], 4
          %s297 = int_to_ptr.vmem [resolvable:$true] %s296
          %302 = dma.hbm_to_vmem [thread:$0]  %s3, 1024, %s297, [#allocation6], 64, 64, 4
        $region24: #{tpu_custom_call.1} parent=11 // pred_fallthru
          _
        // Predicated region
        $region25: #{tpu_custom_call.1} parent=11 // pred_check
          %p303 = pneg %p147
        $region26: #{tpu_custom_call.1} parent=11 // pred_check_branch
          %305 = sbr.rel (%p303) target = $region28
        $region27: #{tpu_custom_call.1} parent=11 // pred_region
          _
        $region28: #{tpu_custom_call.1} parent=11 // pred_fallthru
          _
        // Predicated region
        $region29: #{tpu_custom_call.1} parent=11 // pred_check
          %p306 = pneg %p168
        $region30: #{tpu_custom_call.1} parent=11 // pred_check_branch
          %308 = sbr.rel (%p306) target = $region32
        $region31: #{tpu_custom_call.1} parent=11 // pred_region
          %s310 = ssub.s32 1024, 1024
          %311 = vsyncadd [#allocation9], %s310
          %s312 = sshll.u32 [#allocation8], 4
          %s313 = int_to_ptr.vmem [resolvable:$true] %s312
          %318 = dma.hbm_to_vmem [thread:$0]  %s5, 1024, %s313, [#allocation9], 64, 64, 4
        $region32: #{tpu_custom_call.1} parent=11 // pred_fallthru
          _
        // Predicated region
        $region33: #{tpu_custom_call.1} parent=11 // pred_check
          %p319 = pneg %p189
        $region34: #{tpu_custom_call.1} parent=11 // pred_check_branch
          %321 = sbr.rel (%p319) target = $region36
        $region35: #{tpu_custom_call.1} parent=11 // pred_region
          _
        $region36: #{tpu_custom_call.1} parent=11 // pred_fallthru
          _
        // Predicated region
        $region37: #{tpu_custom_call.1} parent=11 // pred_check
          %p322 = pneg %p210
        $region38: #{tpu_custom_call.1} parent=11 // pred_check_branch
          %324 = sbr.rel (%p322) target = $region40
        $region39: #{tpu_custom_call.1} parent=11 // pred_region
          %s326 = ssub.s32 2048, 2048
          %327 = vsyncadd [#allocation9], %s326
          %s328 = sshll.u32 [#allocation10], 4
          %s329 = int_to_ptr.vmem [resolvable:$true] %s328
          %334 = dma.hbm_to_vmem [thread:$0]  %s7, 2048, %s329, [#allocation9], 128, 128, 8
        $region40: #{tpu_custom_call.1} parent=11 // pred_fallthru
          _
        // Predicated region
        $region41: #{tpu_custom_call.1} parent=11 // pred_check
          %p335 = pneg %p231
        $region42: #{tpu_custom_call.1} parent=11 // pred_check_branch
          %337 = sbr.rel (%p335) target = $region44
        $region43: #{tpu_custom_call.1} parent=11 // pred_region
          _
        $region44: #{tpu_custom_call.1} parent=11 // pred_fallthru
          _
      $region12: #{tpu_custom_call.1} parent=5 // pred_fallthru
        _
      %p338 = scmp.lt.s32.totalorder %s23, 2
      // Predicated region
      $region45: #{tpu_custom_call.1} parent=5 // pred_check
        %p339 = pneg %p338
      $region46: #{tpu_custom_call.1} parent=5 // pred_check_branch
        %341 = sbr.rel (%p339) target = $region48
      $region47: #{tpu_custom_call.1} parent=5 // pred_region
        // Predicated region
        $region49: #{tpu_custom_call.1} parent=47 // pred_check
          %p342 = pneg %p57
        $region50: #{tpu_custom_call.1} parent=47 // pred_check_branch
          %344 = sbr.rel (%p342) target = $region52
        $region51: #{tpu_custom_call.1} parent=47 // pred_region
          %s345 = sand.u32 %s47, 1
          %s346 = scalar_lea.sflag [#allocation3], %s345
          %s347 = sand.u32 %s47, 1
          %s348 = smul.addr %s347, 8
          %s349 = scalar_lea.vmem [#allocation2], %s348
          %s350 = smul.u32 2, %s31
          %s352 = ssub.s32 128, 128
          %353 = vsyncadd %s346, %s352
          %s354 = smul.addr %s30, 2
          %s355 = sadd.s32 %s350, %s354
          %s356 = smul.addr %s355, 64
          %s357 = scalar_lea.hbm %s0, %s356
          %s358 = sshll.u32 %s349, 4
          %s359 = int_to_ptr.vmem [resolvable:$true] %s358
          %364 = dma.hbm_to_vmem [thread:$0]  %s357, 128, %s359, %s346, 64, 64, 4
        $region52: #{tpu_custom_call.1} parent=47 // pred_fallthru
          _
      $region48: #{tpu_custom_call.1} parent=5 // pred_fallthru
        _
      %p365 = scmp.le.s32.totalorder 1, %s23
      %p366 = scmp.lt.s32.totalorder %s23, 3
      %p367 = pnand %p365, %p366
      %p368 = pneg %p367
      // Predicated region
      $region53: #{tpu_custom_call.1} parent=5 // pred_check
        _
      $region54: #{tpu_custom_call.1} parent=5 // pred_check_branch
        %370 = sbr.rel (%p367) target = $region56
      $region55: #{tpu_custom_call.1} parent=5 // pred_region
        %s371 = ssub.s32 %s23, 1
        %s372 = sand.u32 %s50, 1
        %s373 = scalar_lea.sflag [#allocation3], %s372
        %s374 = sand.u32 %s50, 1
        %s375 = smul.addr %s374, 8
        %s376 = scalar_lea.vmem [#allocation2], %s375
        // Predicated region
        $region57: #{tpu_custom_call.1} parent=55 // pred_check
          %p377 = pneg %p63
        $region58: #{tpu_custom_call.1} parent=55 // pred_check_branch
          %379 = sbr.rel (%p377) target = $region60
        $region59: #{tpu_custom_call.1} parent=55 // pred_region
          %380 = dma.done %s373, 128
        $region60: #{tpu_custom_call.1} parent=55 // pred_fallthru
          _
        // Predicated region
        $region61: #{tpu_custom_call.1} parent=55 // pred_check
          %p381 = pneg %p84
        $region62: #{tpu_custom_call.1} parent=55 // pred_check_branch
          %383 = sbr.rel (%p381) target = $region64
        $region63: #{tpu_custom_call.1} parent=55 // pred_region
          %384 = dma.done [#allocation6], 1024
        $region64: #{tpu_custom_call.1} parent=55 // pred_fallthru
          _
        // Predicated region
        $region65: #{tpu_custom_call.1} parent=55 // pred_check
          %p385 = pneg %p126
        $region66: #{tpu_custom_call.1} parent=55 // pred_check_branch
          %387 = sbr.rel (%p385) target = $region68
        $region67: #{tpu_custom_call.1} parent=55 // pred_region
          %388 = dma.done [#allocation6], 1024
        $region68: #{tpu_custom_call.1} parent=55 // pred_fallthru
          _
        // Predicated region
        $region69: #{tpu_custom_call.1} parent=55 // pred_check
          %p389 = pneg %p168
        $region70: #{tpu_custom_call.1} parent=55 // pred_check_branch
          %391 = sbr.rel (%p389) target = $region72
        $region71: #{tpu_custom_call.1} parent=55 // pred_region
          %392 = dma.done [#allocation9], 1024
        $region72: #{tpu_custom_call.1} parent=55 // pred_fallthru
          _
        // Predicated region
        $region73: #{tpu_custom_call.1} parent=55 // pred_check
          %p393 = pneg %p210
        $region74: #{tpu_custom_call.1} parent=55 // pred_check_branch
          %395 = sbr.rel (%p393) target = $region76
        $region75: #{tpu_custom_call.1} parent=55 // pred_region
          %396 = dma.done [#allocation9], 2048
        $region76: #{tpu_custom_call.1} parent=55 // pred_fallthru
          _
        %s397 = sand.u32 %s50, 1
        %s398 = scalar_lea.sflag [#allocation3], %s397
        %s399 = sand.u32 %s50, 1
        %s400 = smul.addr %s399, 8
        %s401 = scalar_lea.vmem [#allocation2], %s400
        %p402 = pneg %p63
        %p403 = pneg %p60
        %p404 = pneg %p84
        %p405 = pneg %p81
        %p406 = pneg %p105
        %p407 = pneg %p102
        %p408 = pneg %p126
        %p409 = pneg %p123
        %p410 = pneg %p147
        %p411 = pneg %p144
        %p412 = pneg %p168
        %p413 = pneg %p165
        %p414 = pneg %p189
        %p415 = pneg %p186
        %p416 = pneg %p210
        %p417 = pneg %p207
        %p418 = pneg %p231
        %p419 = pneg %p228
        %p420 = pneg %p259
        %p421 = pneg %p256
        %s422 = sand.u32 %s246, 1
        %s423 = scalar_lea.sflag [#allocation4], %s422
        %s424 = sand.u32 %s246, 1
        %s425 = smul.addr %s424, 16
        %s426 = scalar_lea.vmem [#allocation11], %s425
        %s427 = smul.u32 2, %s33
        %s428 = smul.u32 2, %s33
        %v430 = vld [vmem:[%s376] sm:$0xf]
        %v431 = vld [vmem:[%s376 + $0x4] sm:$0xf]
        %v432 = vld [vmem:[#allocation5] sm:$0xf]
        %v433 = vld [vmem:[#allocation5 + $0x4] sm:$0xf]
        %v434 = vld [vmem:[#allocation5 + $0x8] sm:$0xf]
        %v435 = vld [vmem:[#allocation5 + $0xc] sm:$0xf]
        %v436 = vld [vmem:[#allocation5 + $0x10] sm:$0xf]
        %v437 = vld [vmem:[#allocation5 + $0x14] sm:$0xf]
        %v438 = vld [vmem:[#allocation5 + $0x18] sm:$0xf]
        %v439 = vld [vmem:[#allocation5 + $0x1c] sm:$0xf]
        %v440 = vld [vmem:[#allocation5 + $0x20] sm:$0xf]
        %v441 = vld [vmem:[#allocation5 + $0x24] sm:$0xf]
        %v442 = vld [vmem:[#allocation5 + $0x28] sm:$0xf]
        %v443 = vld [vmem:[#allocation5 + $0x2c] sm:$0xf]
        %v444 = vld [vmem:[#allocation5 + $0x30] sm:$0xf]
        %v445 = vld [vmem:[#allocation5 + $0x34] sm:$0xf]
        %v446 = vld [vmem:[#allocation5 + $0x38] sm:$0xf]
        %v447 = vld [vmem:[#allocation5 + $0x3c] sm:$0xf]
        %v448 = vld [vmem:[%s2] sm:$0x1]
        %v450 = vlaneseq
        %v451 = vshrl.u32 %v450, 7
        %v452 = vsub.s32 0, %v451
        %v453 = vrot.slane %v448, %v452
        %v457 = vunpack.c.l.b16 %v430
        %v458 = vunpack.c.l.b16 %v431
        %v459 = vpack.c.b16 %v458, %v457
        %v477 = vunpack.c.l.b16 %v432
        %v478 = vunpack.c.l.b16 %v433
        %v479 = vunpack.c.l.b16 %v434
        %v480 = vunpack.c.l.b16 %v435
        %v481 = vunpack.c.l.b16 %v436
        %v482 = vunpack.c.l.b16 %v437
        %v483 = vunpack.c.l.b16 %v438
        %v484 = vunpack.c.l.b16 %v439
        %v485 = vunpack.c.l.b16 %v440
        %v486 = vunpack.c.l.b16 %v441
        %v487 = vunpack.c.l.b16 %v442
        %v488 = vunpack.c.l.b16 %v443
        %v489 = vunpack.c.l.b16 %v444
        %v490 = vunpack.c.l.b16 %v445
        %v491 = vunpack.c.l.b16 %v446
        %v492 = vunpack.c.l.b16 %v447
        %v493 = vpack.c.b16 %v478, %v477
        %v494 = vpack.c.b16 %v480, %v479
        %v495 = vpack.c.b16 %v482, %v481
        %v496 = vpack.c.b16 %v484, %v483
        %v497 = vpack.c.b16 %v486, %v485
        %v498 = vpack.c.b16 %v488, %v487
        %v499 = vpack.c.b16 %v490, %v489
        %v500 = vpack.c.b16 %v492, %v491
        %509 = vmatprep.subr.bf16.mxu0 0
        %510 = vmatpush1.bf16.msra.mxu0 %v493
        %511 = vmatprep.subr.bf16.mxu0 0
        %512 = vmatpush1.bf16.msra.mxu0 %v494
        %513 = vmatprep.subr.bf16.mxu0 0
        %514 = vmatpush1.bf16.msra.mxu0 %v495
        %515 = vmatprep.subr.bf16.mxu0 0
        %516 = vmatpush1.bf16.msra.mxu0 %v496
        %517 = vmatprep.subr.bf16.mxu0 0
        %518 = vmatpush1.bf16.msra.mxu0 %v497
        %519 = vmatprep.subr.bf16.mxu0 0
        %520 = vmatpush1.bf16.msra.mxu0 %v498
        %521 = vmatprep.subr.bf16.mxu0 0
        %522 = vmatpush1.bf16.msra.mxu0 %v499
        %523 = vmatprep.subr.bf16.mxu0 0
        %524 = vmatpush1.bf16.msra.mxu0 %v500
        %525 = vmatprep.subr.bf16.mxu0 0
        %526 = vmatpush1.bf16.msra.mxu0 0
        %527 = vmatprep.subr.bf16.mxu0 0
        %528 = vmatpush1.bf16.msra.mxu0 0
        %529 = vmatprep.subr.bf16.mxu0 0
        %530 = vmatpush1.bf16.msra.mxu0 0
        %531 = vmatprep.subr.bf16.mxu0 0
        %532 = vmatpush1.bf16.msra.mxu0 0
        %533 = vmatprep.subr.bf16.mxu0 0
        %534 = vmatpush1.bf16.msra.mxu0 0
        %535 = vmatprep.subr.bf16.mxu0 0
        %536 = vmatpush1.bf16.msra.mxu0 0
        %537 = vmatprep.subr.bf16.mxu0 0
        %538 = vmatpush1.bf16.msra.mxu0 0
        %539 = vmatprep.subr.bf16.mxu0 0
        %540 = vmatpush1.bf16.msra.mxu0 0
        %541 = vmatprep.mubr.bf16.mxu0 0
        %542 = vmatmul.mubr.bf16.gmra.mrb[0].mxu0 %v459
        %v543 = vpop.f32.mrb[0].mxu0
        %v544 = vadd.f32 %v453, %v543
        %v545 = vpop.f32.mrb[0].mxu0
        %v546 = vpop.f32.mrb[0].mxu0
        %v547 = vadd.f32 %v453, %v546
        %v548 = vpop.f32.mrb[0].mxu0
        %549 = vdwg.mxu0
        %vm550 = vcmp.gt.f32.partialorder %v544, 0.0
        %vm551 = vcmp.gt.f32.partialorder %v547, 0.0
        %v552 = vmul.f32 %v544, 0.01
        %v553 = vmul.f32 %v547, 0.01
        %v554 = vsel %vm550, %v544, %v552
        %v555 = vsel %vm551, %v547, %v553
        %v556 = vpack.c.bf16 %v555, %v554
        %v557 = vld [vmem:[#allocation7] sm:$0xf]
        %v558 = vld [vmem:[#allocation7 + $0x4] sm:$0xf]
        %v559 = vld [vmem:[#allocation7 + $0x8] sm:$0xf]
        %v560 = vld [vmem:[#allocation7 + $0xc] sm:$0xf]
        %v561 = vld [vmem:[#allocation7 + $0x10] sm:$0xf]
        %v562 = vld [vmem:[#allocation7 + $0x14] sm:$0xf]
        %v563 = vld [vmem:[#allocation7 + $0x18] sm:$0xf]
        %v564 = vld [vmem:[#allocation7 + $0x1c] sm:$0xf]
        %v565 = vld [vmem:[#allocation7 + $0x20] sm:$0xf]
        %v566 = vld [vmem:[#allocation7 + $0x24] sm:$0xf]
        %v567 = vld [vmem:[#allocation7 + $0x28] sm:$0xf]
        %v568 = vld [vmem:[#allocation7 + $0x2c] sm:$0xf]
        %v569 = vld [vmem:[#allocation7 + $0x30] sm:$0xf]
        %v570 = vld [vmem:[#allocation7 + $0x34] sm:$0xf]
        %v571 = vld [vmem:[#allocation7 + $0x38] sm:$0xf]
        %v572 = vld [vmem:[#allocation7 + $0x3c] sm:$0xf]
        %v573 = vld [vmem:[%s4] sm:$0x1]
        %v575 = vlaneseq
        %v576 = vshrl.u32 %v575, 7
        %v577 = vsub.s32 0, %v576
        %v578 = vrot.slane %v573, %v577
        %v596 = vunpack.c.l.b16 %v557
        %v597 = vunpack.c.l.b16 %v558
        %v598 = vunpack.c.l.b16 %v559
        %v599 = vunpack.c.l.b16 %v560
        %v600 = vunpack.c.l.b16 %v561
        %v601 = vunpack.c.l.b16 %v562
        %v602 = vunpack.c.l.b16 %v563
        %v603 = vunpack.c.l.b16 %v564
        %v604 = vunpack.c.l.b16 %v565
        %v605 = vunpack.c.l.b16 %v566
        %v606 = vunpack.c.l.b16 %v567
        %v607 = vunpack.c.l.b16 %v568
        %v608 = vunpack.c.l.b16 %v569
        %v609 = vunpack.c.l.b16 %v570
        %v610 = vunpack.c.l.b16 %v571
        %v611 = vunpack.c.l.b16 %v572
        %v612 = vpack.c.b16 %v597, %v596
        %v613 = vpack.c.b16 %v599, %v598
        %v614 = vpack.c.b16 %v601, %v600
        %v615 = vpack.c.b16 %v603, %v602
        %v616 = vpack.c.b16 %v605, %v604
        %v617 = vpack.c.b16 %v607, %v606
        %v618 = vpack.c.b16 %v609, %v608
        %v619 = vpack.c.b16 %v611, %v610
        %628 = vmatprep.subr.bf16.mxu0 0
        %629 = vmatpush1.bf16.msra.mxu0 %v612
        %630 = vmatprep.subr.bf16.mxu0 0
        %631 = vmatpush1.bf16.msra.mxu0 %v613
        %632 = vmatprep.subr.bf16.mxu0 0
        %633 = vmatpush1.bf16.msra.mxu0 %v614
        %634 = vmatprep.subr.bf16.mxu0 0
        %635 = vmatpush1.bf16.msra.mxu0 %v615
        %636 = vmatprep.subr.bf16.mxu0 0
        %637 = vmatpush1.bf16.msra.mxu0 %v616
        %638 = vmatprep.subr.bf16.mxu0 0
        %639 = vmatpush1.bf16.msra.mxu0 %v617
        %640 = vmatprep.subr.bf16.mxu0 0
        %641 = vmatpush1.bf16.msra.mxu0 %v618
        %642 = vmatprep.subr.bf16.mxu0 0
        %643 = vmatpush1.bf16.msra.mxu0 %v619
        %644 = vmatprep.subr.bf16.mxu0 0
        %645 = vmatpush1.bf16.msra.mxu0 0
        %646 = vmatprep.subr.bf16.mxu0 0
        %647 = vmatpush1.bf16.msra.mxu0 0
        %648 = vmatprep.subr.bf16.mxu0 0
        %649 = vmatpush1.bf16.msra.mxu0 0
        %650 = vmatprep.subr.bf16.mxu0 0
        %651 = vmatpush1.bf16.msra.mxu0 0
        %652 = vmatprep.subr.bf16.mxu0 0
        %653 = vmatpush1.bf16.msra.mxu0 0
        %654 = vmatprep.subr.bf16.mxu0 0
        %655 = vmatpush1.bf16.msra.mxu0 0
        %656 = vmatprep.subr.bf16.mxu0 0
        %657 = vmatpush1.bf16.msra.mxu0 0
        %658 = vmatprep.subr.bf16.mxu0 0
        %659 = vmatpush1.bf16.msra.mxu0 0
        %660 = vmatprep.mubr.bf16.mxu0 0
        %661 = vmatmul.mubr.bf16.gmra.mrb[0].mxu0 %v556
        %v662 = vpop.f32.mrb[0].mxu0
        %v663 = vadd.f32 %v578, %v662
        %v664 = vpop.f32.mrb[0].mxu0
        %v665 = vpop.f32.mrb[0].mxu0
        %v666 = vadd.f32 %v578, %v665
        %v667 = vpop.f32.mrb[0].mxu0
        %668 = vdwg.mxu0
        %vm669 = vcmp.gt.f32.partialorder %v663, 0.0
        %vm670 = vcmp.gt.f32.partialorder %v666, 0.0
        %v671 = vmul.f32 %v663, 0.01
        %v672 = vmul.f32 %v666, 0.01
        %v673 = vsel %vm669, %v663, %v671
        %v674 = vsel %vm670, %v666, %v672
        %v675 = vpack.c.bf16 %v674, %v673
        %v676 = vld [vmem:[#allocation8] sm:$0xf]
        %v677 = vld [vmem:[#allocation8 + $0x4] sm:$0xf]
        %v678 = vld [vmem:[#allocation8 + $0x8] sm:$0xf]
        %v679 = vld [vmem:[#allocation8 + $0xc] sm:$0xf]
        %v680 = vld [vmem:[#allocation8 + $0x10] sm:$0xf]
        %v681 = vld [vmem:[#allocation8 + $0x14] sm:$0xf]
        %v682 = vld [vmem:[#allocation8 + $0x18] sm:$0xf]
        %v683 = vld [vmem:[#allocation8 + $0x1c] sm:$0xf]
        %v684 = vld [vmem:[#allocation8 + $0x20] sm:$0xf]
        %v685 = vld [vmem:[#allocation8 + $0x24] sm:$0xf]
        %v686 = vld [vmem:[#allocation8 + $0x28] sm:$0xf]
        %v687 = vld [vmem:[#allocation8 + $0x2c] sm:$0xf]
        %v688 = vld [vmem:[#allocation8 + $0x30] sm:$0xf]
        %v689 = vld [vmem:[#allocation8 + $0x34] sm:$0xf]
        %v690 = vld [vmem:[#allocation8 + $0x38] sm:$0xf]
        %v691 = vld [vmem:[#allocation8 + $0x3c] sm:$0xf]
        %v692 = vld [vmem:[%s6] sm:$0x1]
        %v694 = vlaneseq
        %v695 = vshrl.u32 %v694, 7
        %v696 = vsub.s32 0, %v695
        %v697 = vrot.slane %v692, %v696
        %v715 = vunpack.c.l.b16 %v676
        %v716 = vunpack.c.l.b16 %v677
        %v717 = vunpack.c.l.b16 %v678
        %v718 = vunpack.c.l.b16 %v679
        %v719 = vunpack.c.l.b16 %v680
        %v720 = vunpack.c.l.b16 %v681
        %v721 = vunpack.c.l.b16 %v682
        %v722 = vunpack.c.l.b16 %v683
        %v723 = vunpack.c.l.b16 %v684
        %v724 = vunpack.c.l.b16 %v685
        %v725 = vunpack.c.l.b16 %v686
        %v726 = vunpack.c.l.b16 %v687
        %v727 = vunpack.c.l.b16 %v688
        %v728 = vunpack.c.l.b16 %v689
        %v729 = vunpack.c.l.b16 %v690
        %v730 = vunpack.c.l.b16 %v691
        %v731 = vpack.c.b16 %v716, %v715
        %v732 = vpack.c.b16 %v718, %v717
        %v733 = vpack.c.b16 %v720, %v719
        %v734 = vpack.c.b16 %v722, %v721
        %v735 = vpack.c.b16 %v724, %v723
        %v736 = vpack.c.b16 %v726, %v725
        %v737 = vpack.c.b16 %v728, %v727
        %v738 = vpack.c.b16 %v730, %v729
        %747 = vmatprep.subr.bf16.mxu0 0
        %748 = vmatpush1.bf16.msra.mxu0 %v731
        %749 = vmatprep.subr.bf16.mxu0 0
        %750 = vmatpush1.bf16.msra.mxu0 %v732
        %751 = vmatprep.subr.bf16.mxu0 0
        %752 = vmatpush1.bf16.msra.mxu0 %v733
        %753 = vmatprep.subr.bf16.mxu0 0
        %754 = vmatpush1.bf16.msra.mxu0 %v734
        %755 = vmatprep.subr.bf16.mxu0 0
        %756 = vmatpush1.bf16.msra.mxu0 %v735
        %757 = vmatprep.subr.bf16.mxu0 0
        %758 = vmatpush1.bf16.msra.mxu0 %v736
        %759 = vmatprep.subr.bf16.mxu0 0
        %760 = vmatpush1.bf16.msra.mxu0 %v737
        %761 = vmatprep.subr.bf16.mxu0 0
        %762 = vmatpush1.bf16.msra.mxu0 %v738
        %763 = vmatprep.subr.bf16.mxu0 0
        %764 = vmatpush1.bf16.msra.mxu0 0
        %765 = vmatprep.subr.bf16.mxu0 0
        %766 = vmatpush1.bf16.msra.mxu0 0
        %767 = vmatprep.subr.bf16.mxu0 0
        %768 = vmatpush1.bf16.msra.mxu0 0
        %769 = vmatprep.subr.bf16.mxu0 0
        %770 = vmatpush1.bf16.msra.mxu0 0
        %771 = vmatprep.subr.bf16.mxu0 0
        %772 = vmatpush1.bf16.msra.mxu0 0
        %773 = vmatprep.subr.bf16.mxu0 0
        %774 = vmatpush1.bf16.msra.mxu0 0
        %775 = vmatprep.subr.bf16.mxu0 0
        %776 = vmatpush1.bf16.msra.mxu0 0
        %777 = vmatprep.subr.bf16.mxu0 0
        %778 = vmatpush1.bf16.msra.mxu0 0
        %779 = vmatprep.mubr.bf16.mxu0 0
        %780 = vmatmul.mubr.bf16.gmra.mrb[0].mxu0 %v675
        %v781 = vpop.f32.mrb[0].mxu0
        %v782 = vadd.f32 %v697, %v781
        %v783 = vpop.f32.mrb[0].mxu0
        %v784 = vpop.f32.mrb[0].mxu0
        %v785 = vadd.f32 %v697, %v784
        %v786 = vpop.f32.mrb[0].mxu0
        %787 = vdwg.mxu0
        %vm788 = vcmp.gt.f32.partialorder %v782, 0.0
        %vm789 = vcmp.gt.f32.partialorder %v785, 0.0
        %v790 = vmul.f32 %v782, 0.01
        %v791 = vmul.f32 %v785, 0.01
        %v792 = vsel %vm788, %v782, %v790
        %v793 = vsel %vm789, %v785, %v791
        %v794 = vpack.c.bf16 %v793, %v792
        %v795 = vld [vmem:[#allocation10] sm:$0xff]
        %v796 = vld [vmem:[#allocation10 + $0x8] sm:$0xff]
        %v797 = vld [vmem:[#allocation10 + $0x10] sm:$0xff]
        %v798 = vld [vmem:[#allocation10 + $0x18] sm:$0xff]
        %v799 = vld [vmem:[#allocation10 + $0x20] sm:$0xff]
        %v800 = vld [vmem:[#allocation10 + $0x28] sm:$0xff]
        %v801 = vld [vmem:[#allocation10 + $0x30] sm:$0xff]
        %v802 = vld [vmem:[#allocation10 + $0x38] sm:$0xff]
        %v803 = vld [vmem:[#allocation10 + $0x40] sm:$0xff]
        %v804 = vld [vmem:[#allocation10 + $0x48] sm:$0xff]
        %v805 = vld [vmem:[#allocation10 + $0x50] sm:$0xff]
        %v806 = vld [vmem:[#allocation10 + $0x58] sm:$0xff]
        %v807 = vld [vmem:[#allocation10 + $0x60] sm:$0xff]
        %v808 = vld [vmem:[#allocation10 + $0x68] sm:$0xff]
        %v809 = vld [vmem:[#allocation10 + $0x70] sm:$0xff]
        %v810 = vld [vmem:[#allocation10 + $0x78] sm:$0xff]
        %v811 = vld [vmem:[%s8] sm:$0x3]
        %v813 = vlaneseq
        %v814 = vshrl.u32 %v813, 7
        %v815 = vsub.s32 0, %v814
        %v816 = vrot.slane %v811, %v815
        %v817 = vlaneseq
        %v818 = vshrl.u32 %v817, 7
        %v819 = vsub.s32 1, %v818
        %v820 = vrot.slane %v811, %v819
        %v839 = vunpack.c.l.b16 %v795
        %v840 = vunpack.c.h.b16 %v795
        %v841 = vunpack.c.l.b16 %v796
        %v842 = vunpack.c.h.b16 %v796
        %v843 = vunpack.c.l.b16 %v797
        %v844 = vunpack.c.h.b16 %v797
        %v845 = vunpack.c.l.b16 %v798
        %v846 = vunpack.c.h.b16 %v798
        %v847 = vunpack.c.l.b16 %v799
        %v848 = vunpack.c.h.b16 %v799
        %v849 = vunpack.c.l.b16 %v800
        %v850 = vunpack.c.h.b16 %v800
        %v851 = vunpack.c.l.b16 %v801
        %v852 = vunpack.c.h.b16 %v801
        %v853 = vunpack.c.l.b16 %v802
        %v854 = vunpack.c.h.b16 %v802
        %v855 = vunpack.c.l.b16 %v803
        %v856 = vunpack.c.h.b16 %v803
        %v857 = vunpack.c.l.b16 %v804
        %v858 = vunpack.c.h.b16 %v804
        %v859 = vunpack.c.l.b16 %v805
        %v860 = vunpack.c.h.b16 %v805
        %v861 = vunpack.c.l.b16 %v806
        %v862 = vunpack.c.h.b16 %v806
        %v863 = vunpack.c.l.b16 %v807
        %v864 = vunpack.c.h.b16 %v807
        %v865 = vunpack.c.l.b16 %v808
        %v866 = vunpack.c.h.b16 %v808
        %v867 = vunpack.c.l.b16 %v809
        %v868 = vunpack.c.h.b16 %v809
        %v869 = vunpack.c.l.b16 %v810
        %v870 = vunpack.c.h.b16 %v810
        %v871 = vpack.c.b16 %v841, %v839
        %v872 = vpack.c.b16 %v842, %v840
        %v873 = vpack.c.b16 %v845, %v843
        %v874 = vpack.c.b16 %v846, %v844
        %v875 = vpack.c.b16 %v849, %v847
        %v876 = vpack.c.b16 %v850, %v848
        %v877 = vpack.c.b16 %v853, %v851
        %v878 = vpack.c.b16 %v854, %v852
        %v879 = vpack.c.b16 %v857, %v855
        %v880 = vpack.c.b16 %v858, %v856
        %v881 = vpack.c.b16 %v861, %v859
        %v882 = vpack.c.b16 %v862, %v860
        %v883 = vpack.c.b16 %v865, %v863
        %v884 = vpack.c.b16 %v866, %v864
        %v885 = vpack.c.b16 %v869, %v867
        %v886 = vpack.c.b16 %v870, %v868
        %903 = vmatprep.subr.bf16.mxu0 %v872
        %904 = vmatpush1.bf16.msra.mxu0 %v871
        %905 = vmatprep.subr.bf16.mxu0 %v874
        %906 = vmatpush1.bf16.msra.mxu0 %v873
        %907 = vmatprep.subr.bf16.mxu0 %v876
        %908 = vmatpush1.bf16.msra.mxu0 %v875
        %909 = vmatprep.subr.bf16.mxu0 %v878
        %910 = vmatpush1.bf16.msra.mxu0 %v877
        %911 = vmatprep.subr.bf16.mxu0 %v880
        %912 = vmatpush1.bf16.msra.mxu0 %v879
        %913 = vmatprep.subr.bf16.mxu0 %v882
        %914 = vmatpush1.bf16.msra.mxu0 %v881
        %915 = vmatprep.subr.bf16.mxu0 %v884
        %916 = vmatpush1.bf16.msra.mxu0 %v883
        %917 = vmatprep.subr.bf16.mxu0 %v886
        %918 = vmatpush1.bf16.msra.mxu0 %v885
        %919 = vmatprep.subr.bf16.mxu0 0
        %920 = vmatpush1.bf16.msra.mxu0 0
        %921 = vmatprep.subr.bf16.mxu0 0
        %922 = vmatpush1.bf16.msra.mxu0 0
        %923 = vmatprep.subr.bf16.mxu0 0
        %924 = vmatpush1.bf16.msra.mxu0 0
        %925 = vmatprep.subr.bf16.mxu0 0
        %926 = vmatpush1.bf16.msra.mxu0 0
        %927 = vmatprep.subr.bf16.mxu0 0
        %928 = vmatpush1.bf16.msra.mxu0 0
        %929 = vmatprep.subr.bf16.mxu0 0
        %930 = vmatpush1.bf16.msra.mxu0 0
        %931 = vmatprep.subr.bf16.mxu0 0
        %932 = vmatpush1.bf16.msra.mxu0 0
        %933 = vmatprep.subr.bf16.mxu0 0
        %934 = vmatpush1.bf16.msra.mxu0 0
        %935 = vmatprep.mubr.bf16.mxu0 0
        %936 = vmatmul.mubr.bf16.gmra.mrb[0].mxu0 %v794
        %v937 = vpop.f32.mrb[0].mxu0
        %v938 = vadd.f32 %v816, %v937
        %v939 = vpop.f32.mrb[0].mxu0
        %v940 = vadd.f32 %v820, %v939
        %v941 = vpop.f32.mrb[0].mxu0
        %v942 = vadd.f32 %v816, %v941
        %v943 = vpop.f32.mrb[0].mxu0
        %v944 = vadd.f32 %v820, %v943
        %945 = vdwg.mxu0
        %v946 = vpack.c.bf16 %v942, %v938
        %v947 = vpack.c.bf16 %v944, %v940
        %v949 = vunpack.c.l.b16 %v946
        %v950 = vunpack.c.h.b16 %v946
        %v951 = vpack.c.b16 %v949, %v949
        %v952 = vpack.c.b16 %v950, %v950
        %955 = vst [vmem:[%s426] sm:$0xf] %v951
        %956 = vst [vmem:[%s426 + $0x4] sm:$0xf] %v952
        %v958 = vunpack.c.l.b16 %v947
        %v959 = vunpack.c.h.b16 %v947
        %v960 = vpack.c.b16 %v958, %v958
        %v961 = vpack.c.b16 %v959, %v959
        %s964 = scalar_lea.vmem %s426, 8 [#allocation11]
        %965 = vst [vmem:[%s964] sm:$0xf] %v960
        %966 = vst [vmem:[%s964 + $0x4] sm:$0xf] %v961
        %s967 = sand.u32 %s246, 1
        %s968 = scalar_lea.sflag [#allocation4], %s967
        %s969 = sand.u32 %s246, 1
        %s970 = smul.addr %s969, 16
        %s971 = scalar_lea.vmem [#allocation11], %s970
        // Predicated region
        $region77: #{tpu_custom_call.1} parent=55 // pred_check
          %p972 = pneg %p256
        $region78: #{tpu_custom_call.1} parent=55 // pred_check_branch
          %974 = sbr.rel (%p972) target = $region80
        $region79: #{tpu_custom_call.1} parent=55 // pred_region
          %s975 = smul.u32 2, %s33
          %s977 = ssub.s32 256, 256
          %978 = vsyncadd %s968, %s977
          %s979 = smul.addr %s32, 4
          %s980 = sadd.s32 %s975, %s979
          %s981 = smul.addr %s980, 64
          %s982 = scalar_lea.hbm %s9, %s981
          %s983 = sshll.u32 %s971, 4
          %s984 = int_to_ptr.vmem [resolvable:$true] %s983
          %989 = dma.vmem_to_hbm [thread:$0]  %s984, 256, %s982, %s968, 64, 64, 4
        $region80: #{tpu_custom_call.1} parent=55 // pred_fallthru
          _
      $region56: #{tpu_custom_call.1} parent=5 // pred_fallthru
        _
      %p990 = scmp.le.s32.totalorder 2, %s23
      // Predicated region
      $region81: #{tpu_custom_call.1} parent=5 // pred_check
        %p991 = pneg %p990
      $region82: #{tpu_custom_call.1} parent=5 // pred_check_branch
        %993 = sbr.rel (%p991) target = $region84
      $region83: #{tpu_custom_call.1} parent=5 // pred_region
        %s994 = ssub.s32 %s23, 2
        // Predicated region
        $region85: #{tpu_custom_call.1} parent=83 // pred_check
          %p995 = pneg %p262
        $region86: #{tpu_custom_call.1} parent=83 // pred_check_branch
          %997 = sbr.rel (%p995) target = $region88
        $region87: #{tpu_custom_call.1} parent=83 // pred_region
          %s998 = sand.u32 %s247, 1
          %s999 = scalar_lea.sflag [#allocation4], %s998
          %s1000 = sand.u32 %s247, 1
          %s1001 = smul.addr %s1000, 16
          %s1002 = scalar_lea.vmem [#allocation11], %s1001
          %1003 = dma.done %s999, 256
        $region88: #{tpu_custom_call.1} parent=83 // pred_fallthru
          _
      $region84: #{tpu_custom_call.1} parent=5 // pred_fallthru
        _
    $region6: #{tpu_custom_call.1} parent=1 // loop_footer
      %s27 = sadd.s32 1, %s23
    $region7: #{tpu_custom_call.1} parent=1 // loop_footer_branch
      %22 = sbr.rel target = $region3
    $region8: #{tpu_custom_call.1} parent=1 // loop_exit
      _
    %1004 = vsyncpa [#allocation3], 1
    %s1005 = scalar_lea.sflag [#allocation3], 1
    %1006 = vsyncpa %s1005, 1
    %1007 = vsyncpa [#allocation6], 1
    %1008 = vsyncpa [#allocation9], 1
    %1009 = vsyncpa [#allocation4], 1
    %s1010 = scalar_lea.sflag [#allocation4], 1
    %1011 = vsyncpa %s1010, 1

</llo_original>
